<compile_context>
chip_gen: v7x
topology: tpu7x:2x2x1
jax: 0.10.0
libtpu: 0.0.40
codegen_flags: <defaults>
</compile_context>

<pallas_src>
import jax
import jax.numpy as jnp
from jax.experimental import pallas as pl
from jax.experimental.pallas import tpu as pltpu


def _max_pool_kernel(x_ref, val_ref, idx_ref, vacc_ref, iacc_ref):
    # x_ref: (TB, TN, D) tile; reduce over axis 1 (the pooled / sublane axis).
    k = pl.program_id(1)
    tn = x_ref.shape[1]

    @pl.when(k == 0)
    def _():
        vacc_ref[...] = jnp.full_like(vacc_ref, -jnp.inf)
        iacc_ref[...] = jnp.zeros_like(iacc_ref)

    x = x_ref[...].astype(jnp.float32)                       # (TB, TN, D)

    # Chunk-local max and first-occurrence argmax along the pooled axis.
    loc_max = jnp.max(x, axis=1)                             # (TB, D)
    n_idx = jax.lax.broadcasted_iota(jnp.int32, x.shape, 1) + k * tn
    is_max = x == loc_max[:, None, :]
    big = jnp.iinfo(jnp.int32).max
    loc_arg = jnp.min(jnp.where(is_max, n_idx, big), axis=1)  # (TB, D)

    # Strict '>' so earlier chunks win ties -> first maximal index overall.
    better = loc_max > vacc_ref[...]
    vacc_ref[...] = jnp.where(better, loc_max, vacc_ref[...])
    iacc_ref[...] = jnp.where(better, loc_arg, iacc_ref[...])

    @pl.when(k == pl.num_programs(1) - 1)
    def _():
        val_ref[...] = vacc_ref[...].astype(val_ref.dtype)
        idx_ref[...] = iacc_ref[...]


def _pick_block(total: int, target: int, align: int) -> int:
    """Largest divisor of `total` that is <= target and is a multiple of
    `align` (or, failing that, the full axis, which is always a legal block)."""
    if total <= target:
        return total
    for d in range(min(total, target), 0, -1):
        if total % d == 0 and d % align == 0:
            return d
    return total


def max_pooling(x: jax.Array):
    """torch.max(x, dim=1) for a (B, N, D) array: returns (values, indices)."""
    B, N, D = x.shape
    itemsize = jnp.dtype(x.dtype).itemsize
    target_tile_bytes = 2 * 1024 * 1024  # ~2 MiB input tile, 2x-buffered -> ~4 MiB

    # Tile the pooled axis N (multiple of 8 for sublane alignment, or full N).
    tn_cap = max(8, target_tile_bytes // max(1, D * itemsize))
    TN = _pick_block(N, tn_cap, 8)
    # Block multiple batch rows per grid step to amortize per-step overhead.
    tb_cap = max(1, target_tile_bytes // max(1, TN * D * itemsize))
    TB = _pick_block(B, tb_cap, 8)

    grid = (B // TB, N // TN)

    values, indices = pl.pallas_call(
        _max_pool_kernel,
        out_shape=(
            jax.ShapeDtypeStruct((B, D), x.dtype),
            jax.ShapeDtypeStruct((B, D), jnp.int32),
        ),
        grid_spec=pltpu.PrefetchScalarGridSpec(
            num_scalar_prefetch=0,
            grid=grid,
            in_specs=[pl.BlockSpec((TB, TN, D), lambda i, k: (i, k, 0))],
            out_specs=[
                pl.BlockSpec((TB, D), lambda i, k: (i, 0)),
                pl.BlockSpec((TB, D), lambda i, k: (i, 0)),
            ],
            scratch_shapes=[
                pltpu.VMEM((TB, D), jnp.float32),   # running max
                pltpu.VMEM((TB, D), jnp.int32),     # running argmax
            ],
        ),
        compiler_params=pltpu.CompilerParams(
            dimension_semantics=("parallel", "arbitrary"),
            vmem_limit_bytes=32 * 1024 * 1024,
        ),
    )(x)
    return values, indices


if __name__ == "__main__":
    key = jax.random.PRNGKey(0)
    B, N, D = 2, 8, 32
    x = jax.random.normal(key, (B, N, D), dtype=jnp.float32)

    vals, idxs = max_pooling(x)
    vals = jax.block_until_ready(vals)
    idxs = jax.block_until_ready(idxs)

    # Reference: torch.max(x, dim=1) -> (values, indices).
    ref_vals = jnp.max(x, axis=1)
    ref_idxs = jnp.argmax(x, axis=1).astype(jnp.int32)

    assert vals.shape == (B, D) and idxs.shape == (B, D)
    assert vals.dtype == x.dtype and idxs.dtype == jnp.int32
    assert jnp.allclose(vals, ref_vals, atol=1e-6, rtol=1e-6)
    assert jnp.array_equal(idxs, ref_idxs)

    print("KERNEL_OK")
</pallas_src>

<mosaic_0001>
module attributes {stable_mosaic.version = 11 : i64} {
  func.func @_max_pool_kernel(%arg0: i32, %arg1: i32, %arg2: memref<2x8x32xf32, #tpu.memory_space<vmem>>, %arg3: memref<2x32xf32, #tpu.memory_space<vmem>>, %arg4: memref<2x32xi32, #tpu.memory_space<vmem>>, %arg5: memref<2x32xf32, #tpu.memory_space<vmem>>, %arg6: memref<2x32xi32, #tpu.memory_space<vmem>>) attributes {dimension_semantics = [#tpu.dimension_semantics<parallel>, #tpu.dimension_semantics<arbitrary>], iteration_bounds = array<i64: 1, 1>, scalar_prefetch = 0 : i64, scratch_operands = 2 : i64, tpu.core_type = #tpu.core_type<tc>, window_params = [{transform_indices = @transform_0, window_bounds = array<i64: 2, 8, 32>}, {transform_indices = @transform_1, window_bounds = array<i64: 2, 32>}, {transform_indices = @transform_2, window_bounds = array<i64: 2, 32>}]} {
    %c0_i32 = arith.constant 0 : i32
    %0 = arith.cmpi eq, %arg1, %c0_i32 : i32
    %1 = arith.extui %0 : i1 to i32
    %c0_i32_0 = arith.constant 0 : i32
    %2 = arith.cmpi ne, %1, %c0_i32_0 : i32
    scf.if %2 {
      %cst_16 = arith.constant 0xFF800000 : f32
      %26 = vector.broadcast %cst_16 : f32 to vector<2x32xf32>
      %c0_17 = arith.constant 0 : index
      %c0_18 = arith.constant 0 : index
      %27 = vector.load %arg5[%c0_17, %c0_18] : memref<2x32xf32, #tpu.memory_space<vmem>>, vector<2x32xf32>
      tpu.vector_store %arg5[%c0_17, %c0_18], %26 {strides = array<i32>} : memref<2x32xf32, #tpu.memory_space<vmem>>, vector<2x32xf32>,
      %c0_i32_19 = arith.constant 0 : i32
      %28 = vector.broadcast %c0_i32_19 : i32 to vector<2x32xi32>
      %c0_20 = arith.constant 0 : index
      %c0_21 = arith.constant 0 : index
      %29 = vector.load %arg6[%c0_20, %c0_21] : memref<2x32xi32, #tpu.memory_space<vmem>>, vector<2x32xi32>
      tpu.vector_store %arg6[%c0_20, %c0_21], %28 {strides = array<i32>} : memref<2x32xi32, #tpu.memory_space<vmem>>, vector<2x32xi32>,
    } else {
    }
    %c0 = arith.constant 0 : index
    %c0_1 = arith.constant 0 : index
    %c0_2 = arith.constant 0 : index
    %3 = vector.load %arg2[%c0, %c0_1, %c0_2] : memref<2x8x32xf32, #tpu.memory_space<vmem>>, vector<2x8x32xf32>
    %cst = arith.constant dense<0xFF800000> : vector<2x32xf32>
    %4 = vector.multi_reduction <maximumf>, %3, %cst [1] : vector<2x8x32xf32> to vector<2x32xf32>
    %5 = tpu.iota {dimensions = array<i32: 1>} : vector<2x8x32xi32>
    %c8_i32 = arith.constant 8 : i32
    %6 = arith.muli %arg1, %c8_i32 : i32
    %7 = vector.broadcast %6 : i32 to vector<2x8x32xi32>
    %8 = arith.addi %5, %7 : vector<2x8x32xi32>
    %9 = vector.shape_cast %4 : vector<2x32xf32> to vector<2x1x32xf32>
    %10 = vector.broadcast %9 : vector<2x1x32xf32> to vector<2x8x32xf32>
    %11 = arith.cmpf oeq, %3, %10 : vector<2x8x32xf32>
    %c2147483647_i32 = arith.constant 2147483647 : i32
    %12 = vector.broadcast %c2147483647_i32 : i32 to vector<2x8x32xi32>
    %13 = arith.select %11, %8, %12 : vector<2x8x32xi1>, vector<2x8x32xi32>
    %cst_3 = arith.constant dense<2147483647> : vector<2x32xi32>
    %14 = vector.multi_reduction <minsi>, %13, %cst_3 [1] : vector<2x8x32xi32> to vector<2x32xi32>
    %c0_4 = arith.constant 0 : index
    %c0_5 = arith.constant 0 : index
    %15 = vector.load %arg5[%c0_4, %c0_5] : memref<2x32xf32, #tpu.memory_space<vmem>>, vector<2x32xf32>
    %16 = arith.cmpf ogt, %4, %15 : vector<2x32xf32>
    %c0_6 = arith.constant 0 : index
    %c0_7 = arith.constant 0 : index
    %17 = vector.load %arg5[%c0_6, %c0_7] : memref<2x32xf32, #tpu.memory_space<vmem>>, vector<2x32xf32>
    %18 = arith.select %16, %4, %17 : vector<2x32xi1>, vector<2x32xf32>
    %c0_8 = arith.constant 0 : index
    %c0_9 = arith.constant 0 : index
    %19 = vector.load %arg5[%c0_8, %c0_9] : memref<2x32xf32, #tpu.memory_space<vmem>>, vector<2x32xf32>
    tpu.vector_store %arg5[%c0_8, %c0_9], %18 {strides = array<i32>} : memref<2x32xf32, #tpu.memory_space<vmem>>, vector<2x32xf32>,
    %c0_10 = arith.constant 0 : index
    %c0_11 = arith.constant 0 : index
    %20 = vector.load %arg6[%c0_10, %c0_11] : memref<2x32xi32, #tpu.memory_space<vmem>>, vector<2x32xi32>
    %21 = arith.select %16, %14, %20 : vector<2x32xi1>, vector<2x32xi32>
    %c0_12 = arith.constant 0 : index
    %c0_13 = arith.constant 0 : index
    %22 = vector.load %arg6[%c0_12, %c0_13] : memref<2x32xi32, #tpu.memory_space<vmem>>, vector<2x32xi32>
    tpu.vector_store %arg6[%c0_12, %c0_13], %21 {strides = array<i32>} : memref<2x32xi32, #tpu.memory_space<vmem>>, vector<2x32xi32>,
    %c0_i32_14 = arith.constant 0 : i32
    %23 = arith.cmpi eq, %arg1, %c0_i32_14 : i32
    %24 = arith.extui %23 : i1 to i32
    %c0_i32_15 = arith.constant 0 : i32
    %25 = arith.cmpi ne, %24, %c0_i32_15 : i32
    scf.if %25 {
      %c0_16 = arith.constant 0 : index
      %c0_17 = arith.constant 0 : index
      %26 = vector.load %arg5[%c0_16, %c0_17] : memref<2x32xf32, #tpu.memory_space<vmem>>, vector<2x32xf32>
      %c0_18 = arith.constant 0 : index
      %c0_19 = arith.constant 0 : index
      %27 = vector.load %arg3[%c0_18, %c0_19] : memref<2x32xf32, #tpu.memory_space<vmem>>, vector<2x32xf32>
      tpu.vector_store %arg3[%c0_18, %c0_19], %26 {strides = array<i32>} : memref<2x32xf32, #tpu.memory_space<vmem>>, vector<2x32xf32>,
      %c0_20 = arith.constant 0 : index
      %c0_21 = arith.constant 0 : index
      %28 = vector.load %arg6[%c0_20, %c0_21] : memref<2x32xi32, #tpu.memory_space<vmem>>, vector<2x32xi32>
      %c0_22 = arith.constant 0 : index
      %c0_23 = arith.constant 0 : index
      %29 = vector.load %arg4[%c0_22, %c0_23] : memref<2x32xi32, #tpu.memory_space<vmem>>, vector<2x32xi32>
      tpu.vector_store %arg4[%c0_22, %c0_23], %28 {strides = array<i32>} : memref<2x32xi32, #tpu.memory_space<vmem>>, vector<2x32xi32>,
    } else {
    }
    return
  }
  func.func @transform_0(%arg0: i32, %arg1: i32) -> (i32, i32, i32) {
    %c0_i32 = arith.constant 0 : i32
    %c0_i32_0 = arith.constant 0 : i32
    return %arg0, %arg1, %c0_i32 : i32, i32, i32
  }
  func.func @transform_1(%arg0: i32, %arg1: i32) -> (i32, i32) {
    %c0_i32 = arith.constant 0 : i32
    %c0_i32_0 = arith.constant 0 : i32
    return %arg0, %c0_i32 : i32, i32
  }
  func.func @transform_2(%arg0: i32, %arg1: i32) -> (i32, i32) {
    %c0_i32 = arith.constant 0 : i32
    %c0_i32_0 = arith.constant 0 : i32
    return %arg0, %c0_i32 : i32, i32
  }
}

</mosaic_0001>

<llo_original>
// kernel: tpu_custom_call.1
$region0: #{tpu_custom_call.1}
  #allocation0 [shape = 'u32[]', space=smem, size = 0x4, offset = 0x4, fixed_abs, tag = 'smem constant byte address 0x4 - core index']
  #allocation1 [shape = 'u32[144,128]{1,0:T(1,128)}', space=vmem, size = 0x12000, scoped, tag = 'internal scratch']
  #allocation2 [shape = 'f32[2,32]{1,0:T(2,128)}', space=vmem, size = 0x400, scoped, tag = 'scratch operand']
  #allocation3 [shape = 's32[2,32]{1,0:T(2,128)}', space=vmem, size = 0x400, scoped, tag = 'scratch operand']
  %s0 = inlined_call_operand.hbm [shape: f32[2,8,32], index: 0, kind: input, shape index: {}]
  %s1 = inlined_call_operand.hbm [shape: f32[2,32], index: 1, kind: output, shape index: {0}]
  %s2 = inlined_call_operand.hbm [shape: s32[2,32], index: 2, kind: output, shape index: {1}]
  %3 = xla_tuple %s1, %s2
  %s4 = sld [smem:[#allocation0]]
  $region34: #{tpu_custom_call.1} parent=0
    _
  %s6 = ssub.s32 1, %s4
  %s7 = scalar_select 0, %s6, %s4
  $region1: #{tpu_custom_call.1} parent=0
    #allocation4 [shape = 'u8[8192]{0}', space=vmem, size = 0x2000, scoped, tag = 'input window, operand 0, single buffered']
    #allocation5 [shape = 's32[1]{0}', space=sflag, size = 0x4, scoped, tag = 'scoped memory for tpu_custom_call.1']
    #allocation6 [shape = 's32[1]{0}', space=sflag, size = 0x4, scoped, tag = 'scoped memory for tpu_custom_call.1']
    #allocation7 [shape = 'u8[1024]{0}', space=vmem, size = 0x400, scoped, tag = 'output window, operand 0, single buffered']
    #allocation8 [shape = 'u8[1024]{0}', space=vmem, size = 0x400, scoped, tag = 'output window, operand 1, single buffered']
    #allocation9 [shape = 's32[1]{0}', space=sflag, size = 0x4, scoped, tag = 'scoped memory for tpu_custom_call.1']
    %8 = vsyncpa [#allocation5], 0
    %9 = vsyncpa [#allocation6], 0
    %10 = vsyncpa [#allocation9], 0
    // Predicated region
    $region2: #{tpu_custom_call.1} parent=1 // pred_check
      _
    $region3: #{tpu_custom_call.1} parent=1 // pred_check_branch
      %12 = sbr.rel (0) target = $region5
    $region4: #{tpu_custom_call.1} parent=1 // pred_region
      %s14 = ssub.s32 256, 256
      %15 = vsyncadd [#allocation5], %s14
      %s16 = sshll.u32 [#allocation4], 4
      %s17 = int_to_ptr.vmem [resolvable:$true] %s16
      %22 = dma.hbm_to_vmem [thread:$0]  %s0, 256, %s17, [#allocation5], 128, 128, 8
    $region5: #{tpu_custom_call.1} parent=1 // pred_fallthru
      _
    // Predicated region
    $region6: #{tpu_custom_call.1} parent=1 // pred_check
      _
    $region7: #{tpu_custom_call.1} parent=1 // pred_check_branch
      %24 = sbr.rel (0) target = $region9
    $region8: #{tpu_custom_call.1} parent=1 // pred_region
      %25 = dma.done [#allocation5], 256
    $region9: #{tpu_custom_call.1} parent=1 // pred_fallthru
      _
    %p26 = scmp.eq.s32.totalorder 0, 0
    // Predicated region
    $region10: #{tpu_custom_call.1} parent=1 // pred_check
      %p27 = pneg %p26
    $region11: #{tpu_custom_call.1} parent=1 // pred_check_branch
      %29 = sbr.rel (%p27) target = $region13
    $region12: #{tpu_custom_call.1} parent=1 // pred_region
      %vm30 = vcmask 254976
      %31 = vst.msk [vmem:[#allocation2] sm:$0x3] %vm30, -inf
      %32 = vst.msk [vmem:[#allocation3] sm:$0x3] %vm30, 0
    $region13: #{tpu_custom_call.1} parent=1 // pred_fallthru
      _
    %v33 = vld [vmem:[#allocation4] sm:$0xff]
    %v34 = vld [vmem:[#allocation4 + $0x8] sm:$0xff]
    %vm35 = vcmask 261120
    %v36 = vsel %vm35, %v33, -inf
    %v37 = vrot.slane %v36, 4
    %v38 = vmax.f32 %v36, %v37
    %v39 = vrot.slane %v38, 2
    %v40 = vmax.f32 %v38, %v39
    %v41 = vrot.slane %v40, 1
    %v42 = vmax.f32 %v40, %v41
    %v43 = vsel %vm35, %v34, -inf
    %v44 = vrot.slane %v43, 4
    %v45 = vmax.f32 %v43, %v44
    %v46 = vrot.slane %v45, 2
    %v47 = vmax.f32 %v45, %v46
    %v48 = vrot.slane %v47, 1
    %v49 = vmax.f32 %v47, %v48
    %v50 = vlaneseq
    %v51 = vshrl.u32 %v50, 7
    %s52 = smul.u32 0, 8
    %v53 = vstv %s52
    %v54 = vadd.s32 %v51, %v53
    %vm55 = vcmp.eq.f32.partialorder %v33, %v42
    %vm56 = vcmp.eq.f32.partialorder %v34, %v49
    %v57 = vsel %vm55, %v54, 2147483647
    %v58 = vsel %vm56, %v54, 2147483647
    %v59 = vsel %vm35, %v57, 2147483647
    %v60 = vrot.slane %v59, 4
    %vm61 = vcmp.lt.s32.totalorder %v59, %v60
    %v62 = vsel %vm61, %v59, %v60
    %v63 = vrot.slane %v62, 2
    %vm64 = vcmp.lt.s32.totalorder %v62, %v63
    %v65 = vsel %vm64, %v62, %v63
    %v66 = vrot.slane %v65, 1
    %vm67 = vcmp.lt.s32.totalorder %v65, %v66
    %v68 = vsel %vm67, %v65, %v66
    %v69 = vsel %vm35, %v58, 2147483647
    %v70 = vrot.slane %v69, 4
    %vm71 = vcmp.lt.s32.totalorder %v69, %v70
    %v72 = vsel %vm71, %v69, %v70
    %v73 = vrot.slane %v72, 2
    %vm74 = vcmp.lt.s32.totalorder %v72, %v73
    %v75 = vsel %vm74, %v72, %v73
    %v76 = vrot.slane %v75, 1
    %vm77 = vcmp.lt.s32.totalorder %v75, %v76
    %v78 = vsel %vm77, %v75, %v76
    %v79 = vld [vmem:[#allocation2] sm:$0x3]
    %v81 = vrot.slane %v79, 1
    %vm84 = vcmp.gt.f32.partialorder %v42, %v79
    %vm85 = vcmp.gt.f32.partialorder %v49, %v81
    %v86 = vsel %vm84, %v42, %v79
    %v87 = vsel %vm85, %v49, %v81
    %v90 = vrot.slane %v87, 7
    %vm91 = vcmask 1041409
    %v92 = vsel %vm91, %v90, %v86
    %vm94 = vcmask 254976
    %95 = vst.msk [vmem:[#allocation2] sm:$0x3] %vm94, %v92
    %v96 = vld [vmem:[#allocation3] sm:$0x3]
    %v97 = vrot.slane %v96, 1
    %v98 = vsel %vm84, %v68, %v96
    %v99 = vsel %vm85, %v78, %v97
    %v100 = vrot.slane %v99, 7
    %v101 = vsel %vm91, %v100, %v98
    %102 = vst.msk [vmem:[#allocation3] sm:$0x3] %vm94, %v101
    // Predicated region
    $region14: #{tpu_custom_call.1} parent=1 // pred_check
      %p103 = pneg %p26
    $region15: #{tpu_custom_call.1} parent=1 // pred_check_branch
      %105 = sbr.rel (%p103) target = $region17
    $region16: #{tpu_custom_call.1} parent=1 // pred_region
      %v106 = vld [vmem:[#allocation2] sm:$0x3]
      %107 = vst.msk [vmem:[#allocation7] sm:$0x3] %vm94, %v106
      %v108 = vld [vmem:[#allocation3] sm:$0x3]
      %109 = vst.msk [vmem:[#allocation8] sm:$0x3] %vm94, %v108
    $region17: #{tpu_custom_call.1} parent=1 // pred_fallthru
      _
    // Predicated region
    $region18: #{tpu_custom_call.1} parent=1 // pred_check
      _
    $region19: #{tpu_custom_call.1} parent=1 // pred_check_branch
      %111 = sbr.rel (0) target = $region21
    $region20: #{tpu_custom_call.1} parent=1 // pred_region
      %s113 = ssub.s32 32, 32
      %114 = vsyncadd [#allocation6], %s113
      %s116 = sshll.u32 [#allocation7], 4
      %s117 = int_to_ptr.vmem [resolvable:$true] %s116
      %119 = dma.vmem_to_hbm [thread:$0]  %s117, 32, %s1, [#allocation6]
    $region21: #{tpu_custom_call.1} parent=1 // pred_fallthru
      _
    // Predicated region
    $region22: #{tpu_custom_call.1} parent=1 // pred_check
      _
    $region23: #{tpu_custom_call.1} parent=1 // pred_check_branch
      %121 = sbr.rel (0) target = $region25
    $region24: #{tpu_custom_call.1} parent=1 // pred_region
      %s123 = ssub.s32 32, 32
      %124 = vsyncadd [#allocation9], %s123
      %s126 = sshll.u32 [#allocation8], 4
      %s127 = int_to_ptr.vmem [resolvable:$true] %s126
      %129 = dma.vmem_to_hbm [thread:$0]  %s127, 32, %s2, [#allocation9]
    $region25: #{tpu_custom_call.1} parent=1 // pred_fallthru
      _
    // Predicated region
    $region26: #{tpu_custom_call.1} parent=1 // pred_check
      _
    $region27: #{tpu_custom_call.1} parent=1 // pred_check_branch
      %131 = sbr.rel (0) target = $region29
    $region28: #{tpu_custom_call.1} parent=1 // pred_region
      %132 = dma.done [#allocation6], 32
    $region29: #{tpu_custom_call.1} parent=1 // pred_fallthru
      _
    // Predicated region
    $region30: #{tpu_custom_call.1} parent=1 // pred_check
      _
    $region31: #{tpu_custom_call.1} parent=1 // pred_check_branch
      %134 = sbr.rel (0) target = $region33
    $region32: #{tpu_custom_call.1} parent=1 // pred_region
      %135 = dma.done [#allocation9], 32
    $region33: #{tpu_custom_call.1} parent=1 // pred_fallthru
      _
    %136 = vsyncpa [#allocation5], 1
    %137 = vsyncpa [#allocation6], 1
    %138 = vsyncpa [#allocation9], 1

</llo_original>
